<compile_context>
chip_gen: v6e
topology: v6e:2x2x1
jax: 0.10.0
libtpu: 0.0.40
codegen_flags: <defaults>
</compile_context>

<pallas_src>
import functools

import jax
import jax.numpy as jnp
from jax.experimental import pallas as pl
from jax.experimental.pallas import tpu as pltpu

_LANE = 128
_SUB = 8
_NEG_BIG = jnp.float32(-1e30)  # pad-column bias: exp(-1e30 - m) underflows to 0


def _round_up(x, m):
    return ((x + m - 1) // m) * m


def pg_forward_kernel(x_ref, w1_ref, b1_ref, w2_ref, b2_ref, o_ref):
    # fc1: bf16 MXU matmul, f32 accumulate; bias add + ReLU on the VPU.
    h = jnp.dot(x_ref[...], w1_ref[...], preferred_element_type=jnp.float32)
    h = jnp.maximum(h + b1_ref[...], 0.0)                 # broadcast [1, H]

    # Output layer on the lane-padded (128-wide) bf16 weights; pad columns of
    # w2 are exactly zero and their bias is -1e30, so they vanish in softmax.
    logits = jnp.dot(h.astype(jnp.bfloat16), w2_ref[...],
                     preferred_element_type=jnp.float32)
    logits = logits + b2_ref[...]

    # Numerically stable softmax over the last dim.  Padded columns contribute
    # exp(-1e30 - m) == 0, so the real probabilities are exact.
    m = jnp.max(logits, axis=-1, keepdims=True)
    e = jnp.exp(logits - m)
    denom = jnp.sum(e, axis=-1, keepdims=True)
    probs = e * pl.reciprocal(denom, approx=True)         # EUP reciprocal

    # Store only the real N_out columns -> small HBM writeback, no wrapper
    # column-slice afterwards.
    n_out = o_ref.shape[-1]
    o_ref[...] = probs[:, :n_out].astype(o_ref.dtype)


def pack_params(w1, b1, w2, b2):
    """One-time (per parameter update) packing, hoisted out of the forward:
    bf16 weights for the MXU, output layer lane-padded to 128 columns
    (zero weight columns + -1e30 bias so padded logits vanish in softmax)."""
    n_in, H = w1.shape
    n_out = w2.shape[1]
    n_out_pad = _round_up(max(n_out, 1), _LANE)
    w1p = w1.astype(jnp.bfloat16)
    b1p = b1.reshape(1, H).astype(jnp.float32)
    w2p = jnp.zeros((H, n_out_pad), jnp.bfloat16).at[:, :n_out].set(
        w2.astype(jnp.bfloat16))
    b2p = jnp.full((1, n_out_pad), _NEG_BIG, jnp.float32).at[:, :n_out].set(
        b2.reshape(1, n_out).astype(jnp.float32))
    return w1p, b1p, w2p, b2p


@functools.partial(jax.jit, static_argnames=("n_out", "block_rows"))
def policy_gradients_forward(x, w1p, b1p, w2p, b2p, *, n_out, block_rows=1024):
    """Fused fc1 -> ReLU -> out -> softmax(dim=1).

    x:   [B, N_in] float32 (or bfloat16)
    w1p: [N_in, H] bf16, b1p: [1, H] f32      (from pack_params)
    w2p: [H, 128k] bf16, b2p: [1, 128k] f32   (lane-padded, from pack_params)
    returns [B, n_out] float32 action probabilities.
    """
    B, n_in = x.shape
    H = w1p.shape[1]
    n_out_pad = w2p.shape[1]
    assert w1p.shape[0] == n_in

    # bf16 activations: halves x's HBM read; accumulation stays f32 in-kernel.
    x = x.astype(jnp.bfloat16)

    # Pad the batch only up to a sublane multiple (<= 7 extra zero rows).
    B8 = _round_up(max(B, 1), _SUB)
    if B8 != B:
        x = jnp.pad(x, ((0, B8 - B), (0, 0)))

    # Row tiling: big tiles for HBM-roofline efficiency, but at least 2 grid
    # steps for mid/large batches so v7x's two TensorCores both get work.
    # The last tile may be ragged; Pallas masks its out-of-bounds rows.
    n_tiles = pl.cdiv(B8, block_rows)
    if B8 >= 2 * _SUB:
        n_tiles = max(n_tiles, 2)
    tm = _round_up(pl.cdiv(B8, n_tiles), _SUB)
    grid = (pl.cdiv(B8, tm),)

    out = pl.pallas_call(
        pg_forward_kernel,
        out_shape=jax.ShapeDtypeStruct((B8, n_out), jnp.float32),
        grid=grid,
        in_specs=[
            pl.BlockSpec((tm, n_in), lambda i: (i, 0)),      # streamed x tile
            pl.BlockSpec((n_in, H), lambda i: (0, 0)),       # resident w1
            pl.BlockSpec((1, H), lambda i: (0, 0)),          # resident b1
            pl.BlockSpec((H, n_out_pad), lambda i: (0, 0)),  # resident w2 (padded)
            pl.BlockSpec((1, n_out_pad), lambda i: (0, 0)),  # resident b2 (padded)
        ],
        out_specs=pl.BlockSpec((tm, n_out), lambda i: (i, 0)),
        compiler_params=pltpu.CompilerParams(
            dimension_semantics=("parallel",)),              # 2 TCs on v7x
    )(x, w1p, b1p, w2p, b2p)

    return out if B8 == B else out[:B]


def init_params(key, n_in, n_out, n_hidden=128):
    """Mirror the PyTorch module: weights ~ N(0, 0.1); biases keep nn.Linear's
    default U(-1/sqrt(fan_in), +1/sqrt(fan_in))."""
    k1, k2, k3, k4 = jax.random.split(key, 4)
    w1 = (0.1 * jax.random.normal(k1, (n_in, n_hidden))).astype(jnp.float32)
    w2 = (0.1 * jax.random.normal(k2, (n_hidden, n_out))).astype(jnp.float32)
    bound1 = 1.0 / jnp.sqrt(jnp.float32(n_in))
    bound2 = 1.0 / jnp.sqrt(jnp.float32(n_hidden))
    b1 = jax.random.uniform(k3, (1, n_hidden), jnp.float32, -bound1, bound1)
    b2 = jax.random.uniform(k4, (1, n_out), jnp.float32, -bound2, bound2)
    return w1, b1, w2, b2


def reference_forward_f32(x, w1, b1, w2, b2):
    h = jnp.maximum(x @ w1 + b1, 0.0)
    return jax.nn.softmax(h @ w2 + b2.reshape(1, -1), axis=1)


def reference_forward_bf16(x, w1, b1, w2, b2):
    # Matches the kernel's bf16-operand / f32-accumulate matmuls.
    h = jnp.dot(x.astype(jnp.bfloat16), w1.astype(jnp.bfloat16),
                preferred_element_type=jnp.float32) + b1
    h = jnp.maximum(h, 0.0)
    logits = jnp.dot(h.astype(jnp.bfloat16), w2.astype(jnp.bfloat16),
                     preferred_element_type=jnp.float32) + b2.reshape(1, -1)
    return jax.nn.softmax(logits, axis=1)


if __name__ == "__main__":
    key = jax.random.PRNGKey(0)
    N_IN, N_HIDDEN, N_OUT = 32, 128, 8

    kp, kx1, kx2, kx3 = jax.random.split(key, 4)
    w1, b1, w2, b2 = init_params(kp, N_IN, N_OUT, N_HIDDEN)
    packed = pack_params(w1, b1, w2, b2)   # hoisted one-time prep

    # batch=8: single tile (typical RL-step size); batch=3: exercises the
    # <8-row sublane pad; batch=600: two-tile pipelined grid with a ragged
    # last tile (no batch padding at all).
    for kx, batch in zip((kx1, kx2, kx3), (8, 3, 600)):
        x = jax.random.normal(kx, (batch, N_IN), dtype=jnp.float32)
        probs = jax.block_until_ready(
            policy_gradients_forward(x, *packed, n_out=N_OUT))

        assert probs.shape == (batch, N_OUT)
        assert bool(jnp.all(jnp.isfinite(probs)))
        # approx reciprocal + bf16 matmuls -> slightly looser tolerances
        assert jnp.allclose(jnp.sum(probs, axis=1), 1.0, atol=5e-3)
        ref_bf = reference_forward_bf16(x, w1, b1, w2, b2)
        ref_32 = reference_forward_f32(x, w1, b1, w2, b2)
        assert jnp.allclose(probs, ref_bf, atol=5e-3)
        assert jnp.allclose(probs, ref_32, atol=3e-2)

    print("KERNEL_OK")
</pallas_src>

<mosaic_0001>
module attributes {stable_mosaic.version = 11 : i64} {
  func.func @pg_forward_kernel(%arg0: i32, %arg1: memref<8x32xbf16, #tpu.memory_space<vmem>>, %arg2: memref<32x128xbf16, #tpu.memory_space<vmem>>, %arg3: memref<1x128xf32, #tpu.memory_space<vmem>>, %arg4: memref<128x128xbf16, #tpu.memory_space<vmem>>, %arg5: memref<1x128xf32, #tpu.memory_space<vmem>>, %arg6: memref<8x8xf32, #tpu.memory_space<vmem>>) attributes {dimension_semantics = [#tpu.dimension_semantics<parallel>], iteration_bounds = array<i64: 1>, scalar_prefetch = 0 : i64, scratch_operands = 0 : i64, tpu.core_type = #tpu.core_type<tc>, window_params = [{transform_indices = @transform_0, window_bounds = array<i64: 8, 32>}, {pipeline_mode = #tpu.pipeline_mode<synchronous>, transform_indices = @transform_1, window_bounds = array<i64: 32, 128>}, {pipeline_mode = #tpu.pipeline_mode<synchronous>, transform_indices = @transform_2, window_bounds = array<i64: 1, 128>}, {pipeline_mode = #tpu.pipeline_mode<synchronous>, transform_indices = @transform_3, window_bounds = array<i64: 128, 128>}, {pipeline_mode = #tpu.pipeline_mode<synchronous>, transform_indices = @transform_4, window_bounds = array<i64: 1, 128>}, {transform_indices = @transform_5, window_bounds = array<i64: 8, 8>}]} {
    %c0 = arith.constant 0 : index
    %c0_0 = arith.constant 0 : index
    %0 = vector.load %arg1[%c0, %c0_0] : memref<8x32xbf16, #tpu.memory_space<vmem>>, vector<8x32xbf16>
    %c0_1 = arith.constant 0 : index
    %c0_2 = arith.constant 0 : index
    %1 = vector.load %arg2[%c0_1, %c0_2] : memref<32x128xbf16, #tpu.memory_space<vmem>>, vector<32x128xbf16>
    %cst = arith.constant dense<0.000000e+00> : vector<8x128xf32>
    %2 = tpu.matmul %0, %1, %cst {dimension_numbers = #tpu.dot_dimension_numbers<[1], [0], [0], [1], [0, 0, 1, 1], [], []>} : vector<8x32xbf16>, vector<32x128xbf16>, vector<8x128xf32> -> vector<8x128xf32>
    %c0_3 = arith.constant 0 : index
    %c0_4 = arith.constant 0 : index
    %3 = vector.load %arg3[%c0_3, %c0_4] : memref<1x128xf32, #tpu.memory_space<vmem>>, vector<1x128xf32>
    %4 = vector.broadcast %3 : vector<1x128xf32> to vector<8x128xf32>
    %5 = arith.addf %2, %4 : vector<8x128xf32>
    %cst_5 = arith.constant 0.000000e+00 : f32
    %6 = vector.broadcast %cst_5 : f32 to vector<8x128xf32>
    %7 = arith.maximumf %5, %6 : vector<8x128xf32>
    %8 = arith.truncf %7 : vector<8x128xf32> to vector<8x128xbf16>
    %c0_6 = arith.constant 0 : index
    %c0_7 = arith.constant 0 : index
    %9 = vector.load %arg4[%c0_6, %c0_7] : memref<128x128xbf16, #tpu.memory_space<vmem>>, vector<128x128xbf16>
    %cst_8 = arith.constant dense<0.000000e+00> : vector<8x128xf32>
    %10 = tpu.matmul %8, %9, %cst_8 {dimension_numbers = #tpu.dot_dimension_numbers<[1], [0], [0], [1], [0, 0, 1, 1], [], []>} : vector<8x128xbf16>, vector<128x128xbf16>, vector<8x128xf32> -> vector<8x128xf32>
    %c0_9 = arith.constant 0 : index
    %c0_10 = arith.constant 0 : index
    %11 = vector.load %arg5[%c0_9, %c0_10] : memref<1x128xf32, #tpu.memory_space<vmem>>, vector<1x128xf32>
    %12 = vector.broadcast %11 : vector<1x128xf32> to vector<8x128xf32>
    %13 = arith.addf %10, %12 : vector<8x128xf32>
    %cst_11 = arith.constant dense<0xFF800000> : vector<8xf32>
    %14 = vector.multi_reduction <maximumf>, %13, %cst_11 [1] : vector<8x128xf32> to vector<8xf32>
    %15 = vector.shape_cast %14 : vector<8xf32> to vector<8x1xf32>
    %16 = vector.broadcast %15 : vector<8x1xf32> to vector<8x128xf32>
    %17 = arith.subf %13, %16 : vector<8x128xf32>
    %18 = math.exp %17 : vector<8x128xf32>
    %cst_12 = arith.constant dense<0.000000e+00> : vector<8xf32>
    %19 = vector.multi_reduction <add>, %18, %cst_12 [1] : vector<8x128xf32> to vector<8xf32>
    %20 = vector.shape_cast %19 : vector<8xf32> to vector<8x1xf32>
    %21 = tpu.reciprocal %20 {approx = true} : vector<8x1xf32> -> vector<8x1xf32>
    %22 = vector.broadcast %21 : vector<8x1xf32> to vector<8x128xf32>
    %23 = arith.mulf %18, %22 : vector<8x128xf32>
    %24 = vector.extract_strided_slice %23 {offsets = [0, 0], sizes = [8, 8], strides = [1, 1]} : vector<8x128xf32> to vector<8x8xf32>
    %c0_13 = arith.constant 0 : index
    %c0_14 = arith.constant 0 : index
    %25 = vector.load %arg6[%c0_13, %c0_14] : memref<8x8xf32, #tpu.memory_space<vmem>>, vector<8x8xf32>
    tpu.vector_store %arg6[%c0_13, %c0_14], %24 {strides = array<i32>} : memref<8x8xf32, #tpu.memory_space<vmem>>, vector<8x8xf32>,
    return
  }
  func.func @transform_0(%arg0: i32) -> (i32, i32) {
    %c0_i32 = arith.constant 0 : i32
    %c0_i32_0 = arith.constant 0 : i32
    return %arg0, %c0_i32 : i32, i32
  }
  func.func @transform_1(%arg0: i32) -> (i32, i32) {
    %c0_i32 = arith.constant 0 : i32
    %c0_i32_0 = arith.constant 0 : i32
    %c0_i32_1 = arith.constant 0 : i32
    return %c0_i32, %c0_i32_0 : i32, i32
  }
  func.func @transform_2(%arg0: i32) -> (i32, i32) {
    %c0_i32 = arith.constant 0 : i32
    %c0_i32_0 = arith.constant 0 : i32
    %c0_i32_1 = arith.constant 0 : i32
    return %c0_i32, %c0_i32_0 : i32, i32
  }
  func.func @transform_3(%arg0: i32) -> (i32, i32) {
    %c0_i32 = arith.constant 0 : i32
    %c0_i32_0 = arith.constant 0 : i32
    %c0_i32_1 = arith.constant 0 : i32
    return %c0_i32, %c0_i32_0 : i32, i32
  }
  func.func @transform_4(%arg0: i32) -> (i32, i32) {
    %c0_i32 = arith.constant 0 : i32
    %c0_i32_0 = arith.constant 0 : i32
    %c0_i32_1 = arith.constant 0 : i32
    return %c0_i32, %c0_i32_0 : i32, i32
  }
  func.func @transform_5(%arg0: i32) -> (i32, i32) {
    %c0_i32 = arith.constant 0 : i32
    %c0_i32_0 = arith.constant 0 : i32
    return %arg0, %c0_i32 : i32, i32
  }
}

</mosaic_0001>

<llo_original>
// kernel: policy_gradients_forward.1
$region0: #{policy_gradients_forward.1}
  #allocation0 [shape = 'u32[]', space=smem, size = 0x4, offset = 0x4, fixed_abs, tag = 'smem constant byte address 0x4 - core index']
  #allocation1 [shape = 'u32[144,128]{1,0:T(1,128)}', space=vmem, size = 0x12000, scoped, tag = 'internal scratch']
  %s0 = inlined_call_operand.vmem [shape: bf16[8,32], index: 0, kind: input, shape index: {}]
  %s1 = inlined_call_operand.hbm [shape: bf16[32,128], index: 1, kind: input, shape index: {}]
  %s2 = inlined_call_operand.vmem [shape: f32[1,128], index: 2, kind: input, shape index: {}]
  %s3 = inlined_call_operand.hbm [shape: bf16[128,128], index: 3, kind: input, shape index: {}]
  %s4 = inlined_call_operand.vmem [shape: f32[1,128], index: 4, kind: input, shape index: {}]
  %s5 = inlined_call_operand.hbm [shape: f32[8,8], index: 5, kind: output, shape index: {}]
  %s6 = sld [smem:[#allocation0]]
  $region38: #{policy_gradients_forward.1} parent=0
    _
  %s8 = ssub.s32 1, %s6
  %s9 = scalar_select 0, %s8, %s6
  $region1: #{policy_gradients_forward.1} parent=0
    #allocation2 [shape = 'u8[8192]{0}', space=vmem, size = 0x2000, scoped, tag = 'input window, operand 1, single buffered']
    #allocation3 [shape = 's32[1]{0}', space=sflag, size = 0x4, scoped, tag = 'scoped memory for policy_gradients_forward.1']
    #allocation4 [shape = 's32[1]{0}', space=sflag, size = 0x4, scoped, tag = 'scoped memory for policy_gradients_forward.1']
    #allocation5 [shape = 'u8[32768]{0}', space=vmem, size = 0x8000, scoped, tag = 'input window, operand 3, single buffered']
    #allocation6 [shape = 's32[1]{0}', space=sflag, size = 0x4, scoped, tag = 'scoped memory for policy_gradients_forward.1']
    #allocation7 [shape = 'u8[4096]{0}', space=vmem, size = 0x1000, scoped, tag = 'output window, operand 0, single buffered']
    %10 = vsyncpa [#allocation3], 0
    %11 = vsyncpa [#allocation6], 0
    %12 = vsyncpa [#allocation4], 0
    // Predicated region
    $region2: #{policy_gradients_forward.1} parent=1 // pred_check
      _
    $region3: #{policy_gradients_forward.1} parent=1 // pred_check_branch
      %14 = sbr.rel (0) target = $region5
    $region4: #{policy_gradients_forward.1} parent=1 // pred_region
      _
    $region5: #{policy_gradients_forward.1} parent=1 // pred_fallthru
      _
    // Predicated region
    $region6: #{policy_gradients_forward.1} parent=1 // pred_check
      _
    $region7: #{policy_gradients_forward.1} parent=1 // pred_check_branch
      %16 = sbr.rel (0) target = $region9
    $region8: #{policy_gradients_forward.1} parent=1 // pred_region
      %s18 = ssub.s32 256, 256
      %19 = vsyncadd [#allocation3], %s18
      %s20 = sshll.u32 [#allocation2], 4
      %s21 = int_to_ptr.vmem [resolvable:$true] %s20
      %26 = dma.hbm_to_vmem [thread:$0]  %s1, 256, %s21, [#allocation3], 64, 64, 4
    $region9: #{policy_gradients_forward.1} parent=1 // pred_fallthru
      _
    // Predicated region
    $region10: #{policy_gradients_forward.1} parent=1 // pred_check
      _
    $region11: #{policy_gradients_forward.1} parent=1 // pred_check_branch
      %28 = sbr.rel (0) target = $region13
    $region12: #{policy_gradients_forward.1} parent=1 // pred_region
      _
    $region13: #{policy_gradients_forward.1} parent=1 // pred_fallthru
      _
    // Predicated region
    $region14: #{policy_gradients_forward.1} parent=1 // pred_check
      _
    $region15: #{policy_gradients_forward.1} parent=1 // pred_check_branch
      %30 = sbr.rel (0) target = $region17
    $region16: #{policy_gradients_forward.1} parent=1 // pred_region
      %s32 = ssub.s32 1024, 1024
      %33 = vsyncadd [#allocation6], %s32
      %s34 = sshll.u32 [#allocation5], 4
      %s35 = int_to_ptr.vmem [resolvable:$true] %s34
      %40 = dma.hbm_to_vmem [thread:$0]  %s3, 1024, %s35, [#allocation6], 64, 64, 4
    $region17: #{policy_gradients_forward.1} parent=1 // pred_fallthru
      _
    // Predicated region
    $region18: #{policy_gradients_forward.1} parent=1 // pred_check
      _
    $region19: #{policy_gradients_forward.1} parent=1 // pred_check_branch
      %42 = sbr.rel (0) target = $region21
    $region20: #{policy_gradients_forward.1} parent=1 // pred_region
      _
    $region21: #{policy_gradients_forward.1} parent=1 // pred_fallthru
      _
    // Predicated region
    $region22: #{policy_gradients_forward.1} parent=1 // pred_check
      _
    $region23: #{policy_gradients_forward.1} parent=1 // pred_check_branch
      %44 = sbr.rel (0) target = $region25
    $region24: #{policy_gradients_forward.1} parent=1 // pred_region
      %45 = dma.done [#allocation3], 256
    $region25: #{policy_gradients_forward.1} parent=1 // pred_fallthru
      _
    // Predicated region
    $region26: #{policy_gradients_forward.1} parent=1 // pred_check
      _
    $region27: #{policy_gradients_forward.1} parent=1 // pred_check_branch
      %47 = sbr.rel (0) target = $region29
    $region28: #{policy_gradients_forward.1} parent=1 // pred_region
      %48 = dma.done [#allocation6], 1024
    $region29: #{policy_gradients_forward.1} parent=1 // pred_fallthru
      _
    %v50 = vld [vmem:[%s0] sm:$0xf]
    %v51 = vld [vmem:[#allocation2] sm:$0xf]
    %v52 = vld [vmem:[#allocation2 + $0x4] sm:$0xf]
    %v53 = vld [vmem:[#allocation2 + $0x8] sm:$0xf]
    %v54 = vld [vmem:[#allocation2 + $0xc] sm:$0xf]
    %v55 = vld [vmem:[%s2] sm:$0x1]
    %v57 = vlaneseq
    %v58 = vshrl.u32 %v57, 7
    %v59 = vsub.s32 0, %v58
    %v60 = vrot.slane %v55, %v59
    %v66 = vunpack.c.l.b16 %v51
    %v67 = vunpack.c.l.b16 %v52
    %v68 = vunpack.c.l.b16 %v53
    %v69 = vunpack.c.l.b16 %v54
    %v70 = vpack.c.b16 %v67, %v66
    %v71 = vpack.c.b16 %v69, %v68
    %vm74 = vcmask 261120
    %v76 = vsel %vm74, %v50, 0
    %78 = vmatprep.subr.bf16.mxu0 0
    %79 = vmatpush1.bf16.msra.mxu0 0
    %80 = vmatprep.subr.bf16.mxu0 0
    %81 = vmatpush1.bf16.msra.mxu0 0
    %82 = vmatprep.subr.bf16.mxu0 0
    %83 = vmatpush1.bf16.msra.mxu0 0
    %84 = vmatprep.subr.bf16.mxu0 0
    %85 = vmatpush1.bf16.msra.mxu0 0
    %86 = vmatprep.subr.bf16.mxu0 0
    %87 = vmatpush1.bf16.msra.mxu0 0
    %88 = vmatprep.subr.bf16.mxu0 0
    %89 = vmatpush1.bf16.msra.mxu0 0
    %90 = vmatprep.subr.bf16.mxu0 0
    %91 = vmatpush1.bf16.msra.mxu0 %v71
    %92 = vmatprep.subr.bf16.mxu0 0
    %93 = vmatpush1.bf16.msra.mxu0 %v70
    %94 = vmatprep.subr.bf16.mxu0 0
    %95 = vmatpush2.bf16.msra.mxu0 0
    %96 = vmatprep.subr.bf16.mxu0 0
    %97 = vmatpush2.bf16.msra.mxu0 0
    %98 = vmatprep.subr.bf16.mxu0 0
    %99 = vmatpush2.bf16.msra.mxu0 0
    %100 = vmatprep.subr.bf16.mxu0 0
    %101 = vmatpush2.bf16.msra.mxu0 0
    %102 = vmatprep.subr.bf16.mxu0 0
    %103 = vmatpush2.bf16.msra.mxu0 0
    %104 = vmatprep.subr.bf16.mxu0 0
    %105 = vmatpush2.bf16.msra.mxu0 0
    %106 = vmatprep.subr.bf16.mxu0 0
    %107 = vmatpush2.bf16.msra.mxu0 0
    %108 = vmatprep.subr.bf16.mxu0 0
    %109 = vmatpush2.bf16.msra.mxu0 0
    %110 = vmatprep.mubr.bf16.mxu0 0
    %111 = vmatmul.mubr.bf16.gmra.mxu0 %v76
    %v112 = vpop.f32.mrf.mxu0
    %v113 = vadd.f32 %v60, %v112
    %v114 = vpop.f32.mrf.mxu0
    %v115 = vpop.f32.mrf.mxu0
    %v116 = vpop.f32.mrf.mxu0
    %117 = vdwg.mxu0
    %v118 = vmax.f32 %v113, 0.0
    %v119 = vpack.c.bf16 %v118, %v118
    %v120 = vld [vmem:[#allocation5] sm:$0xf]
    %v121 = vld [vmem:[#allocation5 + $0x4] sm:$0xf]
    %v122 = vld [vmem:[#allocation5 + $0x8] sm:$0xf]
    %v123 = vld [vmem:[#allocation5 + $0xc] sm:$0xf]
    %v124 = vld [vmem:[#allocation5 + $0x10] sm:$0xf]
    %v125 = vld [vmem:[#allocation5 + $0x14] sm:$0xf]
    %v126 = vld [vmem:[#allocation5 + $0x18] sm:$0xf]
    %v127 = vld [vmem:[#allocation5 + $0x1c] sm:$0xf]
    %v128 = vld [vmem:[#allocation5 + $0x20] sm:$0xf]
    %v129 = vld [vmem:[#allocation5 + $0x24] sm:$0xf]
    %v130 = vld [vmem:[#allocation5 + $0x28] sm:$0xf]
    %v131 = vld [vmem:[#allocation5 + $0x2c] sm:$0xf]
    %v132 = vld [vmem:[#allocation5 + $0x30] sm:$0xf]
    %v133 = vld [vmem:[#allocation5 + $0x34] sm:$0xf]
    %v134 = vld [vmem:[#allocation5 + $0x38] sm:$0xf]
    %v135 = vld [vmem:[#allocation5 + $0x3c] sm:$0xf]
    %v136 = vld [vmem:[%s4] sm:$0x1]
    %v138 = vlaneseq
    %v139 = vshrl.u32 %v138, 7
    %v140 = vsub.s32 0, %v139
    %v141 = vrot.slane %v136, %v140
    %v159 = vunpack.c.l.b16 %v120
    %v160 = vunpack.c.l.b16 %v121
    %v161 = vunpack.c.l.b16 %v122
    %v162 = vunpack.c.l.b16 %v123
    %v163 = vunpack.c.l.b16 %v124
    %v164 = vunpack.c.l.b16 %v125
    %v165 = vunpack.c.l.b16 %v126
    %v166 = vunpack.c.l.b16 %v127
    %v167 = vunpack.c.l.b16 %v128
    %v168 = vunpack.c.l.b16 %v129
    %v169 = vunpack.c.l.b16 %v130
    %v170 = vunpack.c.l.b16 %v131
    %v171 = vunpack.c.l.b16 %v132
    %v172 = vunpack.c.l.b16 %v133
    %v173 = vunpack.c.l.b16 %v134
    %v174 = vunpack.c.l.b16 %v135
    %v175 = vpack.c.b16 %v160, %v159
    %v176 = vpack.c.b16 %v162, %v161
    %v177 = vpack.c.b16 %v164, %v163
    %v178 = vpack.c.b16 %v166, %v165
    %v179 = vpack.c.b16 %v168, %v167
    %v180 = vpack.c.b16 %v170, %v169
    %v181 = vpack.c.b16 %v172, %v171
    %v182 = vpack.c.b16 %v174, %v173
    %191 = vmatprep.subr.bf16.mxu0 0
    %192 = vmatpush1.bf16.msra.mxu0 %v182
    %193 = vmatprep.subr.bf16.mxu0 0
    %194 = vmatpush1.bf16.msra.mxu0 %v181
    %195 = vmatprep.subr.bf16.mxu0 0
    %196 = vmatpush1.bf16.msra.mxu0 %v180
    %197 = vmatprep.subr.bf16.mxu0 0
    %198 = vmatpush1.bf16.msra.mxu0 %v179
    %199 = vmatprep.subr.bf16.mxu0 0
    %200 = vmatpush1.bf16.msra.mxu0 %v178
    %201 = vmatprep.subr.bf16.mxu0 0
    %202 = vmatpush1.bf16.msra.mxu0 %v177
    %203 = vmatprep.subr.bf16.mxu0 0
    %204 = vmatpush1.bf16.msra.mxu0 %v176
    %205 = vmatprep.subr.bf16.mxu0 0
    %206 = vmatpush1.bf16.msra.mxu0 %v175
    %207 = vmatprep.subr.bf16.mxu0 0
    %208 = vmatpush2.bf16.msra.mxu0 0
    %209 = vmatprep.subr.bf16.mxu0 0
    %210 = vmatpush2.bf16.msra.mxu0 0
    %211 = vmatprep.subr.bf16.mxu0 0
    %212 = vmatpush2.bf16.msra.mxu0 0
    %213 = vmatprep.subr.bf16.mxu0 0
    %214 = vmatpush2.bf16.msra.mxu0 0
    %215 = vmatprep.subr.bf16.mxu0 0
    %216 = vmatpush2.bf16.msra.mxu0 0
    %217 = vmatprep.subr.bf16.mxu0 0
    %218 = vmatpush2.bf16.msra.mxu0 0
    %219 = vmatprep.subr.bf16.mxu0 0
    %220 = vmatpush2.bf16.msra.mxu0 0
    %221 = vmatprep.subr.bf16.mxu0 0
    %222 = vmatpush2.bf16.msra.mxu0 0
    %223 = vmatprep.mubr.bf16.mxu0 0
    %224 = vmatmul.mubr.bf16.gmra.mxu0 %v119
    %v225 = vpop.f32.mrf.mxu0
    %v226 = vadd.f32 %v141, %v225
    %v227 = vpop.f32.mrf.mxu0
    %v228 = vpop.f32.mrf.mxu0
    %v229 = vpop.f32.mrf.mxu0
    %230 = vdwg.mxu0
    %231 = vmax.xlane.f32.xlu0 %v226
    %v232 = vpop.xlane.xlu0 %231
    %v233 = vsub.f32 %v226, %v232
    %v234 = vmul.f32 %v233, 1.442695
    %v235 = vpow.pop %v234
    %236 = vadd.xlane.f32.xlu0 %v235
    %v237 = vpop.xlane.xlu0 %236
    %v238 = vrcp.pop %v237
    %v239 = vmul.f32 %v235, %v238
    %vm240 = vcmask 64512
    %241 = vst.msk [vmem:[#allocation7] sm:$0xff] %vm240, %v239
    // Predicated region
    $region30: #{policy_gradients_forward.1} parent=1 // pred_check
      _
    $region31: #{policy_gradients_forward.1} parent=1 // pred_check_branch
      %243 = sbr.rel (0) target = $region33
    $region32: #{policy_gradients_forward.1} parent=1 // pred_region
      %s245 = ssub.s32 128, 128
      %246 = vsyncadd [#allocation4], %s245
      %s248 = sshll.u32 [#allocation7], 4
      %s249 = int_to_ptr.vmem [resolvable:$true] %s248
      %251 = dma.vmem_to_hbm [thread:$0]  %s249, 128, %s5, [#allocation4]
    $region33: #{policy_gradients_forward.1} parent=1 // pred_fallthru
      _
    // Predicated region
    $region34: #{policy_gradients_forward.1} parent=1 // pred_check
      _
    $region35: #{policy_gradients_forward.1} parent=1 // pred_check_branch
      %253 = sbr.rel (0) target = $region37
    $region36: #{policy_gradients_forward.1} parent=1 // pred_region
      %254 = dma.done [#allocation4], 128
    $region37: #{policy_gradients_forward.1} parent=1 // pred_fallthru
      _
    %255 = vsyncpa [#allocation3], 1
    %256 = vsyncpa [#allocation6], 1
    %257 = vsyncpa [#allocation4], 1

</llo_original>
